<compile_context>
chip_gen: v7x
topology: tpu7x:2x2x1
jax: 0.10.0
libtpu: 0.0.40
codegen_flags: <defaults>
</compile_context>

<pallas_src>
import functools
import math

import jax
import jax.numpy as jnp
from jax.experimental import pallas as pl
from jax.experimental.pallas import tpu as pltpu

EPSILON = 1e-6
_MAX_BLOCK_ROWS = 4096


def _round_up(v, m):
    return ((v + m - 1) // m) * m


def _vmem_limit_bytes():
    """Explicit scoped-VMEM request.

    v5e/v6e: 128 MiB physical (but only 16/32 MiB scoped by default) -> ask for
    96 MiB so large-hidden bf16 inputs still get 512-1024-row tiles.
    v7x: 64 MiB physical -> keep the request at half capacity (32 MiB).
    """
    try:
        cap = int(pltpu.get_tpu_info().vmem_capacity_bytes)
    except Exception:
        return None
    if cap >= (128 << 20):
        return 96 << 20
    return cap // 2


def _row_axis_semantics():
    """CORE_PARALLEL on v7x (2 TensorCores/chip); plain "parallel" elsewhere."""
    try:
        kind = jax.devices()[0].device_kind.lower()
    except Exception:
        kind = ""
    if "v7" in kind:
        return (pltpu.CORE_PARALLEL,)
    return ("parallel",)


def _l2norm_scaled_kernel(scale_ref, x_ref, o_ref, *, inv_hidden):
    # x_ref/o_ref: (block_rows, hidden) tile in VMEM.
    # NOTE: rows of the ragged last block beyond the true row count hold
    # undefined data; rsqrt on them may produce NaN/Inf, but there is no
    # cross-row reduction and those rows never reach the logical output, so
    # the visible result is unaffected.
    x32 = x_ref[...].astype(jnp.float32)
    ss = jnp.sum(x32 * x32, axis=-1, keepdims=True)      # f32 accumulation
    ms = ss * inv_hidden                                  # divide by true hidden
    # Fold the scalar scale into the per-row inverse norm: one (rows, 1) mul.
    inv = jax.lax.rsqrt(ms + EPSILON) * scale_ref[0]
    # All math in f32; single downcast at the store (matches the reference).
    o_ref[...] = (x32 * inv).astype(o_ref.dtype)


def l2norm_scaled(x, scale=None, *, dim=-1, with_scale=True, block_rows=None):
    """L2NormScaled forward. Normalization axis must be the last axis of `x`
    (dim=-1); leading dims are flattened into a row axis."""
    assert dim in (-1, x.ndim - 1), "kernel normalizes along the last axis"
    orig_shape = x.shape
    hidden = orig_shape[-1]
    rows = math.prod(orig_shape[:-1]) if len(orig_shape) > 1 else 1
    x2d = x.reshape(rows, hidden)

    itemsize = jnp.dtype(x.dtype).itemsize
    # Sub-32-bit dtypes pack rows along sublanes: align row blocks to the
    # packed sublane count (8 for f32, 16 for bf16, 32 for int8/fp8).
    row_align = max(8, 32 // itemsize)

    vmem_limit = _vmem_limit_bytes()

    if block_rows is None:
        limit = vmem_limit if vmem_limit is not None else (32 << 20)
        budget = max(limit - (2 << 20), 4 << 20)   # small headroom for scratch
        # 2 double-buffered input tiles + 2 double-buffered output tiles in the
        # input dtype, plus ~1 f32 temp for the upcast/square.
        per_row = (4 * itemsize + 4) * hidden
        block_rows = max(row_align, budget // per_row)
    block_rows = min(block_rows, _MAX_BLOCK_ROWS, _round_up(rows, row_align))
    block_rows = max(row_align, (block_rows // row_align) * row_align)

    grid = (pl.cdiv(rows, block_rows),)
    # TODO(synk): for extreme hidden (minimum row block x hidden x buffers
    # exceeding the VMEM budget) add a hidden-axis grid dim with an f32
    # partial-sum scratch (accumulate ss across k-blocks, finalize via pl.when)
    # instead of relying on a single full-hidden tile.

    # Scalar scale lives in SMEM; fold a 1.0 when with_scale=False. The
    # CeresTrain module's scale is nn.Parameter(torch.ones(1)) -> scalar only.
    if with_scale:
        assert scale is not None, "with_scale=True requires a scale parameter"
        scale_arr = jnp.asarray(scale, jnp.float32).reshape(-1)
        assert scale_arr.shape == (1,), "L2NormScaled.scale must be a scalar"
    else:
        scale_arr = jnp.ones((1,), dtype=jnp.float32)

    kernel = functools.partial(_l2norm_scaled_kernel,
                               inv_hidden=1.0 / float(hidden))

    def call(row_semantics):
        return pl.pallas_call(
            kernel,
            out_shape=jax.ShapeDtypeStruct((rows, hidden), x.dtype),
            grid_spec=pl.GridSpec(
                grid=grid,
                in_specs=[
                    pl.BlockSpec(memory_space=pltpu.MemorySpace.SMEM),  # scale
                    # Full `hidden` extent as the last block dim: exempt from
                    # the 128-divisibility rule, so unaligned hidden needs no
                    # host-side pad/slice (only a masked trailing store).
                    pl.BlockSpec((block_rows, hidden), lambda i: (i, 0)),
                ],
                out_specs=pl.BlockSpec((block_rows, hidden), lambda i: (i, 0)),
            ),
            compiler_params=pltpu.CompilerParams(
                dimension_semantics=row_semantics,
                vmem_limit_bytes=vmem_limit,
            ),
        )(scale_arr, x2d)

    semantics = _row_axis_semantics()
    try:
        out2d = call(semantics)
    except Exception:
        if semantics == ("parallel",):
            raise
        out2d = call(("parallel",))   # fall back if CORE_PARALLEL is rejected

    return out2d.reshape(orig_shape)


def _reference(x, scale, with_scale):
    x32 = x.astype(jnp.float32)
    ms = jnp.mean(jnp.square(x32), axis=-1, keepdims=True)
    normed = x32 * jax.lax.rsqrt(ms + EPSILON)
    if with_scale:
        normed = normed * jnp.asarray(scale, jnp.float32).reshape(-1)[0]
    return normed.astype(x.dtype)


if __name__ == "__main__":
    key = jax.random.PRNGKey(0)
    k1, k2, k3, k4 = jax.random.split(key, 4)
    batch, seq, hidden = 2, 8, 32

    # f32, with (non-unit) scale -- exercises the folded scale multiply.
    x = jax.random.normal(k1, (batch, seq, hidden), dtype=jnp.float32)
    scale = jnp.full((1,), 1.37, dtype=jnp.float32)
    out = jax.block_until_ready(l2norm_scaled(x, scale, dim=-1, with_scale=True))
    ref = _reference(x, scale, with_scale=True)
    assert out.shape == x.shape
    assert jnp.allclose(out, ref, atol=1e-5, rtol=1e-5), "mismatch vs reference"

    # f32, no scale, ragged row count (rows = 15, not a multiple of 8).
    x2 = jax.random.normal(k2, (3, 5, hidden), dtype=jnp.float32)
    out2 = jax.block_until_ready(l2norm_scaled(x2, None, dim=-1, with_scale=False))
    ref2 = _reference(x2, None, with_scale=False)
    assert out2.shape == x2.shape
    assert jnp.allclose(out2, ref2, atol=1e-5, rtol=1e-5), "mismatch (no scale)"

    # f32, hidden not a multiple of 128 -- masked trailing store, no pad/slice.
    x3 = jax.random.normal(k3, (16, 200), dtype=jnp.float32)
    out3 = jax.block_until_ready(l2norm_scaled(x3, scale, dim=-1, with_scale=True))
    ref3 = _reference(x3, scale, with_scale=True)
    assert jnp.allclose(out3, ref3, atol=1e-5, rtol=1e-5), "mismatch (hidden=200)"

    # bf16 path: all math in f32, single downcast at the store.
    xb = jax.random.normal(k4, (batch, seq, hidden), dtype=jnp.bfloat16)
    outb = jax.block_until_ready(l2norm_scaled(xb, scale, dim=-1, with_scale=True))
    refb = _reference(xb, scale, with_scale=True)
    assert jnp.allclose(outb.astype(jnp.float32), refb.astype(jnp.float32),
                        atol=3e-2, rtol=3e-2), "mismatch (bf16)"

    print("KERNEL_OK")
</pallas_src>

<mosaic_0001>
module attributes {stable_mosaic.version = 11 : i64} {
  func.func @_l2norm_scaled_kernel(%arg0: i32, %arg1: memref<1xf32, #tpu.memory_space<smem>>, %arg2: memref<16x32xf32, #tpu.memory_space<vmem>>, %arg3: memref<16x32xf32, #tpu.memory_space<vmem>>) attributes {dimension_semantics = [#tpu.dimension_semantics<parallel>], iteration_bounds = array<i64: 1>, scalar_prefetch = 0 : i64, scratch_operands = 0 : i64, tpu.core_type = #tpu.core_type<tc>, window_params = [{transform_indices = @transform_0, window_bounds = array<i64: 1>}, {transform_indices = @transform_1, window_bounds = array<i64: 16, 32>}, {transform_indices = @transform_2, window_bounds = array<i64: 16, 32>}]} {
    %c0 = arith.constant 0 : index
    %c0_0 = arith.constant 0 : index
    %0 = vector.load %arg2[%c0, %c0_0] : memref<16x32xf32, #tpu.memory_space<vmem>>, vector<16x32xf32>
    %1 = arith.mulf %0, %0 : vector<16x32xf32>
    %cst = arith.constant dense<0.000000e+00> : vector<16xf32>
    %2 = vector.multi_reduction <add>, %1, %cst [1] : vector<16x32xf32> to vector<16xf32>
    %3 = vector.shape_cast %2 : vector<16xf32> to vector<16x1xf32>
    %cst_1 = arith.constant 3.125000e-02 : f32
    %4 = vector.broadcast %cst_1 : f32 to vector<16x1xf32>
    %5 = arith.mulf %3, %4 : vector<16x1xf32>
    %cst_2 = arith.constant 9.99999997E-7 : f32
    %6 = vector.broadcast %cst_2 : f32 to vector<16x1xf32>
    %7 = arith.addf %5, %6 : vector<16x1xf32>
    %8 = math.rsqrt %7 : vector<16x1xf32>
    %c0_3 = arith.constant 0 : index
    %9 = memref.load %arg1[%c0_3] : memref<1xf32, #tpu.memory_space<smem>>
    %10 = vector.broadcast %9 : f32 to vector<16x1xf32>
    %11 = arith.mulf %8, %10 : vector<16x1xf32>
    %12 = vector.broadcast %11 : vector<16x1xf32> to vector<16x32xf32>
    %13 = arith.mulf %0, %12 : vector<16x32xf32>
    %c0_4 = arith.constant 0 : index
    %c0_5 = arith.constant 0 : index
    %14 = vector.load %arg3[%c0_4, %c0_5] : memref<16x32xf32, #tpu.memory_space<vmem>>, vector<16x32xf32>
    tpu.vector_store %arg3[%c0_4, %c0_5], %13 {strides = array<i32>} : memref<16x32xf32, #tpu.memory_space<vmem>>, vector<16x32xf32>,
    return
  }
  func.func @transform_0(%arg0: i32) -> i32 {
    %c0_i32 = arith.constant 0 : i32
    %c0_i32_0 = arith.constant 0 : i32
    return %c0_i32 : i32
  }
  func.func @transform_1(%arg0: i32) -> (i32, i32) {
    %c0_i32 = arith.constant 0 : i32
    %c0_i32_0 = arith.constant 0 : i32
    return %arg0, %c0_i32 : i32, i32
  }
  func.func @transform_2(%arg0: i32) -> (i32, i32) {
    %c0_i32 = arith.constant 0 : i32
    %c0_i32_0 = arith.constant 0 : i32
    return %arg0, %c0_i32 : i32, i32
  }
}

</mosaic_0001>

<llo_original>
// kernel: tpu_custom_call.1
$region0: #{tpu_custom_call.1}
  #allocation0 [shape = 'u32[]', space=smem, size = 0x4, offset = 0x4, fixed_abs, tag = 'smem constant byte address 0x4 - core index']
  #allocation1 [shape = 'u32[144,128]{1,0:T(1,128)}', space=vmem, size = 0x12000, scoped, tag = 'internal scratch']
  #allocation2 [shape = 'f32[1]{0:T(128)S(6)}', space=smem, size = 0x200, scoped, tag = 'scoped memory for tpu_custom_call.1']
  %s0 = inlined_call_operand.<no memory space> [shape: f32[1], index: 0, kind: input, shape index: {}]
  %s1 = inlined_call_operand.hbm [shape: f32[16,32], index: 1, kind: input, shape index: {}]
  %s2 = inlined_call_operand.hbm [shape: f32[16,32], index: 2, kind: output, shape index: {}]
  %s3 = sld [smem:[#allocation0]]
  $region22: #{tpu_custom_call.1} parent=0
    _
  %s5 = ssub.s32 1, %s3
  %s6 = scalar_select 0, %s5, %s3
  %7 = sst [smem:[#allocation2]] %s0
  $region1: #{tpu_custom_call.1} parent=0
    #allocation3 [shape = 'u8[8192]{0}', space=vmem, size = 0x2000, scoped, tag = 'input window, operand 1, single buffered']
    #allocation4 [shape = 's32[1]{0}', space=sflag, size = 0x4, scoped, tag = 'scoped memory for tpu_custom_call.1']
    #allocation5 [shape = 's32[1]{0}', space=sflag, size = 0x4, scoped, tag = 'scoped memory for tpu_custom_call.1']
    #allocation6 [shape = 'u8[8192]{0}', space=vmem, size = 0x2000, scoped, tag = 'output window, operand 0, single buffered']
    %8 = vsyncpa [#allocation4], 0
    %9 = vsyncpa [#allocation5], 0
    // Predicated region
    $region2: #{tpu_custom_call.1} parent=1 // pred_check
      _
    $region3: #{tpu_custom_call.1} parent=1 // pred_check_branch
      %11 = sbr.rel (0) target = $region5
    $region4: #{tpu_custom_call.1} parent=1 // pred_region
      _
    $region5: #{tpu_custom_call.1} parent=1 // pred_fallthru
      _
    // Predicated region
    $region6: #{tpu_custom_call.1} parent=1 // pred_check
      _
    $region7: #{tpu_custom_call.1} parent=1 // pred_check_branch
      %13 = sbr.rel (0) target = $region9
    $region8: #{tpu_custom_call.1} parent=1 // pred_region
      %s15 = ssub.s32 256, 256
      %16 = vsyncadd [#allocation4], %s15
      %s17 = sshll.u32 [#allocation3], 4
      %s18 = int_to_ptr.vmem [resolvable:$true] %s17
      %23 = dma.hbm_to_vmem [thread:$0]  %s1, 256, %s18, [#allocation4], 128, 128, 8
    $region9: #{tpu_custom_call.1} parent=1 // pred_fallthru
      _
    // Predicated region
    $region10: #{tpu_custom_call.1} parent=1 // pred_check
      _
    $region11: #{tpu_custom_call.1} parent=1 // pred_check_branch
      %25 = sbr.rel (0) target = $region13
    $region12: #{tpu_custom_call.1} parent=1 // pred_region
      %26 = dma.done [#allocation4], 256
    $region13: #{tpu_custom_call.1} parent=1 // pred_fallthru
      _
    %v27 = vld [vmem:[#allocation3] sm:$0xff]
    %v28 = vld [vmem:[#allocation3 + $0x8] sm:$0xff]
    %v29 = vmul.f32 %v27, %v27
    %v30 = vmul.f32 %v28, %v28
    %vm31 = vcmask 261120
    %v32 = vsel %vm31, %v29, 0.0
    %33 = vadd.xlane.f32.xlu0 %v32
    %v34 = vpop.xlane.xlu0 %33
    %v35 = vsel %vm31, %v30, 0.0
    %36 = vadd.xlane.f32.xlu0 %v35
    %v37 = vpop.xlane.xlu0 %36
    %v38 = vmul.f32 %v34, 0.03125
    %v39 = vmul.f32 %v37, 0.03125
    %v40 = vadd.f32 %v38, 1e-06
    %v41 = vadd.f32 %v39, 1e-06
    %v42 = vrsqrt.pop %v40
    %v43 = vrsqrt.pop %v41
    %s44 = sld [smem:[#allocation2]]
    %v45 = vstv %s44
    %v46 = vmul.f32 %v42, %v45
    %v47 = vmul.f32 %v43, %v45
    %v48 = vmul.f32 %v27, %v46
    %v49 = vmul.f32 %v28, %v47
    %50 = vst.msk [vmem:[#allocation6] sm:$0xff] %vm31, %v48
    %51 = vst.msk [vmem:[#allocation6 + $0x8] sm:$0xff] %vm31, %v49
    // Predicated region
    $region14: #{tpu_custom_call.1} parent=1 // pred_check
      _
    $region15: #{tpu_custom_call.1} parent=1 // pred_check_branch
      %53 = sbr.rel (0) target = $region17
    $region16: #{tpu_custom_call.1} parent=1 // pred_region
      %s55 = ssub.s32 256, 256
      %56 = vsyncadd [#allocation5], %s55
      %s57 = sshll.u32 [#allocation6], 4
      %s58 = int_to_ptr.vmem [resolvable:$true] %s57
      %63 = dma.vmem_to_hbm [thread:$0]  %s58, 256, %s2, [#allocation5], 128, 128, 8
    $region17: #{tpu_custom_call.1} parent=1 // pred_fallthru
      _
    // Predicated region
    $region18: #{tpu_custom_call.1} parent=1 // pred_check
      _
    $region19: #{tpu_custom_call.1} parent=1 // pred_check_branch
      %65 = sbr.rel (0) target = $region21
    $region20: #{tpu_custom_call.1} parent=1 // pred_region
      %66 = dma.done [#allocation5], 256
    $region21: #{tpu_custom_call.1} parent=1 // pred_fallthru
      _
    %67 = vsyncpa [#allocation4], 1
    %68 = vsyncpa [#allocation5], 1

</llo_original>
